<compile_context>
chip_gen: v6e
topology: v6e:2x2x1
jax: 0.10.0
libtpu: 0.0.40
codegen_flags: <defaults>
</compile_context>

<pallas_src>
import math

import jax
import jax.numpy as jnp
from jax.experimental import pallas as pl
from jax.experimental.pallas import tpu as pltpu

_LANE = 128
# Packed-sublane multiples by dtype byte-width (f32 -> 8, bf16 -> 16, int8 -> 32).
_SUBLANE_MULT = {4: 8, 2: 16, 1: 32}
# Per-buffer tile budget: 4 MiB keeps (in + out) x 2 pipeline buffers (~16 MiB)
# under the 32 MiB scoped VMEM limit with headroom on every generation,
# including v7x's 64 MiB physical VMEM.
_TILE_BYTES = 4 * 1024 * 1024
# Raise v5e's 16 MiB default scoped limit; matches the v6e/v7x default.
_VMEM_LIMIT_BYTES = 32 * 1024 * 1024


def _round_up(a: int, m: int) -> int:
    return -(-a // m) * m


def _round_down(a: int, m: int) -> int:
    return (a // m) * m


def _identity_kernel(x_ref, o_ref):
    # The whole "forward" of ModelBase: no transformation is defined, so the
    # kernel body is an exact elementwise identity on the current VMEM tile.
    # TODO(synk): ModelBase.forward is abstract (`pass`); subclasses define the
    #             real architecture. Identity is the exact base-class semantic.
    o_ref[...] = x_ref[...]


def _plan_layout(total: int, itemsize: int):
    """Pick a lane-dense 2-D slab (rows_padded, lcols) and a row tile."""
    sub = _SUBLANE_MULT.get(itemsize, 8)

    # Lane axis: wide multiple of 128 for unmasked stores, capped at 2048 and
    # no wider than the data warrants (limits tail padding on tiny inputs).
    lcols = _LANE * max(1, min(2048 // _LANE, total // (_LANE * sub)))

    rows = -(-total // lcols)
    rows_aligned = _round_up(rows, sub)

    # Largest sublane-aligned row tile under the per-buffer VMEM budget.
    budget_rows = max(sub, _round_down(_TILE_BYTES // (lcols * itemsize), sub))
    block_rows = min(budget_rows, rows_aligned)

    # Keep a multi-step grid when the data allows it, so the "parallel" axis
    # can be sharded across v7x's two TensorCores and DMA stays pipelined.
    if block_rows >= rows_aligned and rows_aligned >= 2 * sub:
        block_rows = max(sub, _round_down(rows_aligned // 2, sub))

    rows_padded = _round_up(rows, block_rows)
    return lcols, rows_padded, block_rows


@jax.jit
def model_base_forward(x: jax.Array) -> jax.Array:
    """Pallas-backed forward for ModelBase: identity on the input tensor."""
    orig_shape = x.shape
    dtype = x.dtype
    itemsize = jnp.dtype(dtype).itemsize
    total = math.prod(orig_shape)

    lcols, rows_padded, block_rows = _plan_layout(total, itemsize)
    padded_total = rows_padded * lcols

    flat = x.reshape(total)
    if padded_total != total:
        flat = jnp.pad(flat, (0, padded_total - total))
    x2d = flat.reshape(rows_padded, lcols)

    grid = (rows_padded // block_rows,)

    out2d = pl.pallas_call(
        _identity_kernel,
        out_shape=jax.ShapeDtypeStruct((rows_padded, lcols), dtype),
        grid_spec=pltpu.PrefetchScalarGridSpec(
            num_scalar_prefetch=0,
            grid=grid,
            in_specs=[pl.BlockSpec((block_rows, lcols), lambda i: (i, 0))],
            out_specs=pl.BlockSpec((block_rows, lcols), lambda i: (i, 0)),
        ),
        # Identity forward: the output may reuse the input HBM buffer
        # (XLA inserts a copy if the operand cannot be aliased).
        input_output_aliases={0: 0},
        cost_estimate=pl.CostEstimate(
            flops=0,
            transcendentals=0,
            bytes_accessed=2 * padded_total * itemsize,
        ),
        compiler_params=pltpu.CompilerParams(
            dimension_semantics=("parallel",),
            vmem_limit_bytes=_VMEM_LIMIT_BYTES,
        ),
    )(x2d)

    return out2d.reshape(padded_total)[:total].reshape(orig_shape)


if __name__ == "__main__":
    key = jax.random.PRNGKey(0)
    # Small NCHW input consistent with a conv-style model config:
    # batch=2, channels=4, spatial=16x16.
    x = jax.random.normal(key, (2, 4, 16, 16), dtype=jnp.float32)

    y = model_base_forward(x)
    jax.block_until_ready(y)

    assert y.shape == x.shape and y.dtype == x.dtype
    assert bool(jnp.allclose(y, x)), "identity forward mismatch"
    print("KERNEL_OK")
</pallas_src>

<mosaic_0001>
module attributes {stable_mosaic.version = 11 : i64} {
  func.func @_identity_kernel(%arg0: i32, %arg1: memref<8x256xf32, #tpu.memory_space<vmem>>, %arg2: memref<8x256xf32, #tpu.memory_space<vmem>>) attributes {dimension_semantics = [#tpu.dimension_semantics<parallel>], iteration_bounds = array<i64: 1>, scalar_prefetch = 0 : i64, scratch_operands = 0 : i64, tpu.core_type = #tpu.core_type<tc>, window_params = [{transform_indices = @transform_0, window_bounds = array<i64: 8, 256>}, {transform_indices = @transform_1, window_bounds = array<i64: 8, 256>}]} {
    %c0 = arith.constant 0 : index
    %c0_0 = arith.constant 0 : index
    %0 = vector.load %arg1[%c0, %c0_0] : memref<8x256xf32, #tpu.memory_space<vmem>>, vector<8x256xf32>
    %c0_1 = arith.constant 0 : index
    %c0_2 = arith.constant 0 : index
    %1 = vector.load %arg2[%c0_1, %c0_2] : memref<8x256xf32, #tpu.memory_space<vmem>>, vector<8x256xf32>
    tpu.vector_store %arg2[%c0_1, %c0_2], %0 {strides = array<i32>} : memref<8x256xf32, #tpu.memory_space<vmem>>, vector<8x256xf32>,
    return
  }
  func.func @transform_0(%arg0: i32) -> (i32, i32) {
    %c0_i32 = arith.constant 0 : i32
    %c0_i32_0 = arith.constant 0 : i32
    return %arg0, %c0_i32 : i32, i32
  }
  func.func @transform_1(%arg0: i32) -> (i32, i32) {
    %c0_i32 = arith.constant 0 : i32
    %c0_i32_0 = arith.constant 0 : i32
    return %arg0, %c0_i32 : i32, i32
  }
}

</mosaic_0001>

<llo_original>
// kernel: model_base_forward.1
$region0: #{model_base_forward.1}
  #allocation0 [shape = 'u32[]', space=smem, size = 0x4, offset = 0x4, fixed_abs, tag = 'smem constant byte address 0x4 - core index']
  #allocation1 [shape = 'u32[144,128]{1,0:T(1,128)}', space=vmem, size = 0x12000, scoped, tag = 'internal scratch']
  %s0 = inlined_call_operand.vmem [shape: f32[8,256], index: 0, kind: input, shape index: {}, may-alias: {0,1}]
  %s1 = inlined_call_operand.vmem [shape: f32[8,256], index: 1, kind: output, shape index: {}, may-alias: {0,1}]
  %s2 = sld [smem:[#allocation0]]
  $region14: #{model_base_forward.1} parent=0
    _
  %s4 = ssub.s32 1, %s2
  %s5 = scalar_select 0, %s4, %s2
  // Predicated region
  $region2: #{model_base_forward.1} parent=0 // pred_check
    _
  $region3: #{model_base_forward.1} parent=0 // pred_check_branch
    %7 = sbr.rel (0) target = $region5
  $region4: #{model_base_forward.1} parent=0 // pred_region
    _
  $region5: #{model_base_forward.1} parent=0 // pred_fallthru
    _
  %v8 = vld [vmem:[%s0] sm:$0xff]
  %v9 = vld [vmem:[%s0 + $0x8] sm:$0xff]
  %10 = vst [vmem:[%s1] sm:$0xff] %v8
  %11 = vst [vmem:[%s1 + $0x8] sm:$0xff] %v9
  // Predicated region
  $region6: #{model_base_forward.1} parent=0 // pred_check
    _
  $region7: #{model_base_forward.1} parent=0 // pred_check_branch
    %13 = sbr.rel (0) target = $region9
  $region8: #{model_base_forward.1} parent=0 // pred_region
    _
  $region9: #{model_base_forward.1} parent=0 // pred_fallthru
    _
  // Predicated region
  $region10: #{model_base_forward.1} parent=0 // pred_check
    _
  $region11: #{model_base_forward.1} parent=0 // pred_check_branch
    %15 = sbr.rel (0) target = $region13
  $region12: #{model_base_forward.1} parent=0 // pred_region
    _
  $region13: #{model_base_forward.1} parent=0 // pred_fallthru
    _

</llo_original>
